<compile_context>
chip_gen: v7x
topology: tpu7x:2x2x1
jax: 0.10.0
libtpu: 0.0.40
codegen_flags: <defaults>
</compile_context>

<pallas_src>
import math
import functools

import jax
import jax.numpy as jnp
from jax.experimental import pallas as pl
from jax.experimental.pallas import tpu as pltpu

_EPS = 1e-5  # torch.nn.BatchNorm1d default


def _gbn_kernel(x_ref, gamma_ref, beta_ref, o_ref, *,
                c_blk, cs_pad, csize, n_rows, needs_mask):
    """Normalize c_blk virtual-batch chunks (each cs_pad rows) with per-chunk stats."""
    i = pl.program_id(0)
    d = x_ref.shape[-1]

    xf = x_ref[...].astype(jnp.float32).reshape(c_blk, cs_pad, d)

    # Valid (real-data) row count per chunk in this block; last chunk may be short and
    # grid-overflow chunks have 0 valid rows.
    shape3 = (c_blk, cs_pad, 1)
    chunk_ids = jax.lax.broadcasted_iota(jnp.int32, shape3, 0)
    valid = jnp.clip(
        jnp.int32(n_rows) - (i * jnp.int32(c_blk) + chunk_ids) * jnp.int32(csize),
        0, jnp.int32(csize))

    if needs_mask:
        # Block may contain garbage rows (partial tail / grid overflow): zero them so
        # the one-pass sums below stay exact.  Skipped entirely when statically safe.
        row_ids = jax.lax.broadcasted_iota(jnp.int32, shape3, 1)
        xs = jnp.where(row_ids < valid, xf, 0.0)
    else:
        xs = xf

    inv_cnt = 1.0 / jnp.maximum(valid[:, :1, :], 1).astype(jnp.float32)  # (c_blk,1,1)

    s1 = jnp.sum(xs, axis=1, keepdims=True)            # (c_blk, 1, d)
    s2 = jnp.sum(xs * xs, axis=1, keepdims=True)       # (c_blk, 1, d)
    mean = s1 * inv_cnt
    var = jnp.maximum(s2 * inv_cnt - mean * mean, 0.0)  # biased variance
    inv_std = jax.lax.rsqrt(var + _EPS)                 # EUP slot

    gamma = gamma_ref[...].reshape(1, 1, d)             # f32
    beta = beta_ref[...].reshape(1, 1, d)               # f32
    scale = inv_std * gamma                             # (c_blk, 1, d)
    shift = beta - mean * scale                         # (c_blk, 1, d)

    y = xf * scale + shift                              # 2 full-tile VALU ops
    o_ref[...] = y.reshape(c_blk * cs_pad, d).astype(o_ref.dtype)


def ghost_batch_norm_1d(x, gamma, beta, virtual_batch_size=512):
    """x: (N, D) float array. gamma, beta: (D,) affine params (kept f32). Returns (N, D)."""
    n, d = x.shape
    if n == 0:
        # TODO(synk): empty-batch path (torch would call bn on an empty tensor).
        return x

    num_chunks = math.ceil(n / virtual_batch_size)
    csize = math.ceil(n / num_chunks)                 # torch.chunk chunk size
    itemsize = jnp.dtype(x.dtype).itemsize

    # ---- D (lane) tiling: per-feature stats are independent, so D tiles are exact. ----
    d_blk = 1024 if d > 2048 else d                   # 1024 is a multiple of 128
    grid_d = pl.cdiv(d, d_blk)

    # ---- Batch layout: fast path (no host padding) when chunks are sublane aligned. ----
    fast = (csize % 8 == 0)
    if fast:
        cs_pad = csize
        x_in = x
        rows_total = n
    else:
        # Fallback: pad every chunk to a multiple of 8 rows (padded rows are exact zeros).
        cs_pad = ((csize + 7) // 8) * 8
        n_round = num_chunks * csize
        x_pad = jnp.pad(x, ((0, n_round - n), (0, 0)))
        x_pad = x_pad.reshape(num_chunks, csize, d)
        x_pad = jnp.pad(x_pad, ((0, 0), (0, cs_pad - csize), (0, 0)))
        x_in = x_pad.reshape(num_chunks * cs_pad, d)
        rows_total = num_chunks * cs_pad

    # ---- Chunks per grid step: target ~1 MiB input tiles. ----
    target_rows = max(1, (1 << 20) // max(1, d_blk * itemsize))
    c_blk = max(1, min(num_chunks, target_rows // cs_pad))
    grid_c = pl.cdiv(num_chunks, c_blk)

    # Mask only when the block can see rows that are not valid zero-padded data.
    if fast:
        needs_mask = (grid_c * c_blk * csize != n)
    else:
        needs_mask = (grid_c * c_blk != num_chunks)

    gamma2 = gamma.reshape(1, d).astype(jnp.float32)
    beta2 = beta.reshape(1, d).astype(jnp.float32)

    kernel = functools.partial(
        _gbn_kernel, c_blk=c_blk, cs_pad=cs_pad, csize=csize,
        n_rows=n, needs_mask=needs_mask)

    out = pl.pallas_call(
        kernel,
        out_shape=jax.ShapeDtypeStruct((rows_total, d), x.dtype),
        grid_spec=pltpu.PrefetchScalarGridSpec(
            num_scalar_prefetch=0,
            grid=(grid_c, grid_d),
            in_specs=[
                pl.BlockSpec((c_blk * cs_pad, d_blk), lambda i, j: (i, j)),
                pl.BlockSpec((1, d_blk), lambda i, j: (0, j)),
                pl.BlockSpec((1, d_blk), lambda i, j: (0, j)),
            ],
            out_specs=pl.BlockSpec((c_blk * cs_pad, d_blk), lambda i, j: (i, j)),
        ),
        compiler_params=pltpu.CompilerParams(
            dimension_semantics=("parallel", "parallel")),
        cost_estimate=pl.CostEstimate(
            flops=8 * n * d,
            transcendentals=num_chunks * d,
            bytes_accessed=2 * n * d * itemsize + 8 * d),
    )(x_in, gamma2, beta2)

    if fast:
        return out
    # Strip the per-chunk alignment padding and the batch tail padding (fallback only).
    out = out.reshape(num_chunks, cs_pad, d)[:, :csize, :]
    out = out.reshape(num_chunks * csize, d)[:n]
    return out


def _reference(x, gamma, beta, virtual_batch_size):
    """Pure-JAX reference mirroring the PyTorch forward (training-mode BN per chunk)."""
    n = x.shape[0]
    num_chunks = math.ceil(n / virtual_batch_size)
    csize = math.ceil(n / num_chunks)
    outs = []
    for i in range(num_chunks):
        c = x[i * csize:(i + 1) * csize].astype(jnp.float32)
        if c.shape[0] == 0:
            continue
        mean = c.mean(axis=0, keepdims=True)
        var = ((c - mean) ** 2).mean(axis=0, keepdims=True)  # biased variance
        y = (c - mean) / jnp.sqrt(var + _EPS) * gamma + beta
        outs.append(y.astype(x.dtype))
    return jnp.concatenate(outs, axis=0)


if __name__ == "__main__":
    key = jax.random.PRNGKey(0)

    cases = [
        # (batch, input_dim, virtual_batch_size)
        (64, 128, 16),   # fast path: csize=16, all chunks full, lane-dense output
        (15, 128, 8),    # fast path: csize=8, short last chunk -> in-kernel mask
        (20, 32, 8),     # fallback padded path: csize=7 (not a multiple of 8)
    ]

    for idx, (batch, input_dim, vbs) in enumerate(cases):
        k_x, k_g, k_b = jax.random.split(jax.random.fold_in(key, idx), 3)
        x = jax.random.normal(k_x, (batch, input_dim), dtype=jnp.float32)
        gamma = 1.0 + 0.1 * jax.random.normal(k_g, (input_dim,), dtype=jnp.float32)
        beta = 0.1 * jax.random.normal(k_b, (input_dim,), dtype=jnp.float32)

        out = ghost_batch_norm_1d(x, gamma, beta, vbs)
        out = jax.block_until_ready(out)

        ref = _reference(x, gamma, beta, vbs)
        assert out.shape == (batch, input_dim), (out.shape, batch, input_dim)
        assert jnp.allclose(out, ref, atol=1e-5, rtol=1e-5), \
            f"mismatch vs reference for case {(batch, input_dim, vbs)}"

    print("KERNEL_OK")
</pallas_src>

<mosaic_0001>
module attributes {stable_mosaic.version = 11 : i64} {
  func.func @_gbn_kernel(%arg0: i32, %arg1: i32, %arg2: memref<64x128xf32, #tpu.memory_space<vmem>>, %arg3: memref<1x128xf32, #tpu.memory_space<vmem>>, %arg4: memref<1x128xf32, #tpu.memory_space<vmem>>, %arg5: memref<64x128xf32, #tpu.memory_space<vmem>>) attributes {dimension_semantics = [#tpu.dimension_semantics<parallel>, #tpu.dimension_semantics<parallel>], iteration_bounds = array<i64: 1, 1>, scalar_prefetch = 0 : i64, scratch_operands = 0 : i64, tpu.core_type = #tpu.core_type<tc>, window_params = [{transform_indices = @transform_0, window_bounds = array<i64: 64, 128>}, {transform_indices = @transform_1, window_bounds = array<i64: 1, 128>}, {transform_indices = @transform_2, window_bounds = array<i64: 1, 128>}, {transform_indices = @transform_3, window_bounds = array<i64: 64, 128>}]} {
    %c0 = arith.constant 0 : index
    %c0_0 = arith.constant 0 : index
    %0 = vector.load %arg2[%c0, %c0_0] : memref<64x128xf32, #tpu.memory_space<vmem>>, vector<64x128xf32>
    %1 = vector.shape_cast %0 : vector<64x128xf32> to vector<4x16x128xf32>
    %2 = tpu.iota {dimensions = array<i32: 0>} : vector<4x16x1xi32>
    %c4_i32 = arith.constant 4 : i32
    %3 = arith.muli %arg0, %c4_i32 : i32
    %4 = vector.broadcast %3 : i32 to vector<4x16x1xi32>
    %5 = arith.addi %4, %2 : vector<4x16x1xi32>
    %c16_i32 = arith.constant 16 : i32
    %6 = vector.broadcast %c16_i32 : i32 to vector<4x16x1xi32>
    %7 = arith.muli %5, %6 : vector<4x16x1xi32>
    %c64_i32 = arith.constant 64 : i32
    %8 = vector.broadcast %c64_i32 : i32 to vector<4x16x1xi32>
    %9 = arith.subi %8, %7 : vector<4x16x1xi32>
    %c0_i32 = arith.constant 0 : i32
    %c16_i32_1 = arith.constant 16 : i32
    %10 = vector.broadcast %c0_i32 : i32 to vector<4x16x1xi32>
    %11 = arith.maxsi %10, %9 : vector<4x16x1xi32>
    %12 = vector.broadcast %c16_i32_1 : i32 to vector<4x16x1xi32>
    %13 = arith.minsi %12, %11 : vector<4x16x1xi32>
    %14 = vector.extract_strided_slice %13 {offsets = [0, 0, 0], sizes = [4, 1, 1], strides = [1, 1, 1]} : vector<4x16x1xi32> to vector<4x1x1xi32>
    %c1_i32 = arith.constant 1 : i32
    %15 = vector.broadcast %c1_i32 : i32 to vector<4x1x1xi32>
    %16 = arith.maxsi %14, %15 : vector<4x1x1xi32>
    %17 = arith.sitofp %16 : vector<4x1x1xi32> to vector<4x1x1xf32>
    %cst = arith.constant 1.000000e+00 : f32
    %18 = vector.broadcast %cst : f32 to vector<4x1x1xf32>
    %19 = arith.divf %18, %17 : vector<4x1x1xf32>
    %cst_2 = arith.constant dense<0.000000e+00> : vector<4x128xf32>
    %20 = vector.multi_reduction <add>, %1, %cst_2 [1] : vector<4x16x128xf32> to vector<4x128xf32>
    %21 = vector.shape_cast %20 : vector<4x128xf32> to vector<4x1x128xf32>
    %22 = arith.mulf %1, %1 : vector<4x16x128xf32>
    %cst_3 = arith.constant dense<0.000000e+00> : vector<4x128xf32>
    %23 = vector.multi_reduction <add>, %22, %cst_3 [1] : vector<4x16x128xf32> to vector<4x128xf32>
    %24 = vector.shape_cast %23 : vector<4x128xf32> to vector<4x1x128xf32>
    %25 = vector.broadcast %19 : vector<4x1x1xf32> to vector<4x1x128xf32>
    %26 = arith.mulf %21, %25 : vector<4x1x128xf32>
    %27 = vector.broadcast %19 : vector<4x1x1xf32> to vector<4x1x128xf32>
    %28 = arith.mulf %24, %27 : vector<4x1x128xf32>
    %29 = arith.mulf %26, %26 : vector<4x1x128xf32>
    %30 = arith.subf %28, %29 : vector<4x1x128xf32>
    %cst_4 = arith.constant 0.000000e+00 : f32
    %31 = vector.broadcast %cst_4 : f32 to vector<4x1x128xf32>
    %32 = arith.maximumf %30, %31 : vector<4x1x128xf32>
    %cst_5 = arith.constant 9.99999974E-6 : f32
    %33 = vector.broadcast %cst_5 : f32 to vector<4x1x128xf32>
    %34 = arith.addf %32, %33 : vector<4x1x128xf32>
    %35 = math.rsqrt %34 : vector<4x1x128xf32>
    %c0_6 = arith.constant 0 : index
    %c0_7 = arith.constant 0 : index
    %36 = vector.load %arg3[%c0_6, %c0_7] : memref<1x128xf32, #tpu.memory_space<vmem>>, vector<1x128xf32>
    %37 = vector.shape_cast %36 : vector<1x128xf32> to vector<1x1x128xf32>
    %c0_8 = arith.constant 0 : index
    %c0_9 = arith.constant 0 : index
    %38 = vector.load %arg4[%c0_8, %c0_9] : memref<1x128xf32, #tpu.memory_space<vmem>>, vector<1x128xf32>
    %39 = vector.shape_cast %38 : vector<1x128xf32> to vector<1x1x128xf32>
    %40 = vector.broadcast %37 : vector<1x1x128xf32> to vector<4x1x128xf32>
    %41 = arith.mulf %35, %40 : vector<4x1x128xf32>
    %42 = arith.mulf %26, %41 : vector<4x1x128xf32>
    %43 = vector.broadcast %39 : vector<1x1x128xf32> to vector<4x1x128xf32>
    %44 = arith.subf %43, %42 : vector<4x1x128xf32>
    %45 = vector.broadcast %41 : vector<4x1x128xf32> to vector<4x16x128xf32>
    %46 = arith.mulf %1, %45 : vector<4x16x128xf32>
    %47 = vector.broadcast %44 : vector<4x1x128xf32> to vector<4x16x128xf32>
    %48 = arith.addf %46, %47 : vector<4x16x128xf32>
    %49 = vector.shape_cast %48 : vector<4x16x128xf32> to vector<64x128xf32>
    %c0_10 = arith.constant 0 : index
    %c0_11 = arith.constant 0 : index
    %50 = vector.load %arg5[%c0_10, %c0_11] : memref<64x128xf32, #tpu.memory_space<vmem>>, vector<64x128xf32>
    tpu.vector_store %arg5[%c0_10, %c0_11], %49 {strides = array<i32>} : memref<64x128xf32, #tpu.memory_space<vmem>>, vector<64x128xf32>,
    return
  }
  func.func @transform_0(%arg0: i32, %arg1: i32) -> (i32, i32) {
    %c0_i32 = arith.constant 0 : i32
    return %arg0, %arg1 : i32, i32
  }
  func.func @transform_1(%arg0: i32, %arg1: i32) -> (i32, i32) {
    %c0_i32 = arith.constant 0 : i32
    %c0_i32_0 = arith.constant 0 : i32
    return %c0_i32, %arg1 : i32, i32
  }
  func.func @transform_2(%arg0: i32, %arg1: i32) -> (i32, i32) {
    %c0_i32 = arith.constant 0 : i32
    %c0_i32_0 = arith.constant 0 : i32
    return %c0_i32, %arg1 : i32, i32
  }
  func.func @transform_3(%arg0: i32, %arg1: i32) -> (i32, i32) {
    %c0_i32 = arith.constant 0 : i32
    return %arg0, %arg1 : i32, i32
  }
}

</mosaic_0001>

<llo_original>
// kernel: tpu_custom_call.1
$region0: #{tpu_custom_call.1}
  #allocation0 [shape = 'u32[]', space=smem, size = 0x4, offset = 0x4, fixed_abs, tag = 'smem constant byte address 0x4 - core index']
  #allocation1 [shape = 'u32[144,128]{1,0:T(1,128)}', space=vmem, size = 0x12000, scoped, tag = 'internal scratch']
  %s0 = inlined_call_operand.hbm [shape: f32[64,128], index: 0, kind: input, shape index: {}]
  %s1 = inlined_call_operand.vmem [shape: f32[1,128], index: 1, kind: input, shape index: {}]
  %s2 = inlined_call_operand.vmem [shape: f32[1,128], index: 2, kind: input, shape index: {}]
  %s3 = inlined_call_operand.hbm [shape: f32[64,128], index: 3, kind: output, shape index: {}]
  %s4 = sld [smem:[#allocation0]]
  $region26: #{tpu_custom_call.1} parent=0
    _
  %s6 = ssub.s32 1, %s4
  %s7 = scalar_select 0, %s6, %s4
  $region1: #{tpu_custom_call.1} parent=0
    #allocation2 [shape = 'u8[32768]{0}', space=vmem, size = 0x8000, scoped, tag = 'input window, operand 0, single buffered']
    #allocation3 [shape = 's32[1]{0}', space=sflag, size = 0x4, scoped, tag = 'scoped memory for tpu_custom_call.1']
    #allocation4 [shape = 's32[1]{0}', space=sflag, size = 0x4, scoped, tag = 'scoped memory for tpu_custom_call.1']
    #allocation5 [shape = 'u8[32768]{0}', space=vmem, size = 0x8000, scoped, tag = 'output window, operand 0, single buffered']
    %8 = vsyncpa [#allocation3], 0
    %9 = vsyncpa [#allocation4], 0
    // Predicated region
    $region2: #{tpu_custom_call.1} parent=1 // pred_check
      _
    $region3: #{tpu_custom_call.1} parent=1 // pred_check_branch
      %11 = sbr.rel (0) target = $region5
    $region4: #{tpu_custom_call.1} parent=1 // pred_region
      %s13 = ssub.s32 1024, 1024
      %14 = vsyncadd [#allocation3], %s13
      %s15 = sshll.u32 [#allocation2], 4
      %s16 = int_to_ptr.vmem [resolvable:$true] %s15
      %21 = dma.hbm_to_vmem [thread:$0]  %s0, 1024, %s16, [#allocation3], 128, 128, 8
    $region5: #{tpu_custom_call.1} parent=1 // pred_fallthru
      _
    // Predicated region
    $region6: #{tpu_custom_call.1} parent=1 // pred_check
      _
    $region7: #{tpu_custom_call.1} parent=1 // pred_check_branch
      %23 = sbr.rel (0) target = $region9
    $region8: #{tpu_custom_call.1} parent=1 // pred_region
      _
    $region9: #{tpu_custom_call.1} parent=1 // pred_fallthru
      _
    // Predicated region
    $region10: #{tpu_custom_call.1} parent=1 // pred_check
      _
    $region11: #{tpu_custom_call.1} parent=1 // pred_check_branch
      %25 = sbr.rel (0) target = $region13
    $region12: #{tpu_custom_call.1} parent=1 // pred_region
      _
    $region13: #{tpu_custom_call.1} parent=1 // pred_fallthru
      _
    // Predicated region
    $region14: #{tpu_custom_call.1} parent=1 // pred_check
      _
    $region15: #{tpu_custom_call.1} parent=1 // pred_check_branch
      %27 = sbr.rel (0) target = $region17
    $region16: #{tpu_custom_call.1} parent=1 // pred_region
      %28 = dma.done [#allocation3], 1024
    $region17: #{tpu_custom_call.1} parent=1 // pred_fallthru
      _
    %v29 = vld [vmem:[#allocation2] sm:$0xff]
    %v30 = vld [vmem:[#allocation2 + $0x8] sm:$0xff]
    %v31 = vld [vmem:[#allocation2 + $0x10] sm:$0xff]
    %v32 = vld [vmem:[#allocation2 + $0x18] sm:$0xff]
    %v33 = vld [vmem:[#allocation2 + $0x20] sm:$0xff]
    %v34 = vld [vmem:[#allocation2 + $0x28] sm:$0xff]
    %v35 = vld [vmem:[#allocation2 + $0x30] sm:$0xff]
    %v36 = vld [vmem:[#allocation2 + $0x38] sm:$0xff]
    %s37 = smul.u32 0, 4
    %v38 = vstv %s37
    %v39 = vadd.s32 %v38, 1
    %v40 = vadd.s32 %v38, 2
    %v41 = vadd.s32 %v38, 3
    %v42 = vmul.u32 %v38, 16
    %v43 = vmul.u32 %v39, 16
    %v44 = vmul.u32 %v40, 16
    %v45 = vmul.u32 %v41, 16
    %v46 = vsub.s32 64, %v42
    %v47 = vsub.s32 64, %v43
    %v48 = vsub.s32 64, %v44
    %v49 = vsub.s32 64, %v45
    %vm50 = vcmp.gt.s32.totalorder %v46, 0
    %v51 = vsel %vm50, %v46, 0
    %vm52 = vcmp.gt.s32.totalorder %v47, 0
    %v53 = vsel %vm52, %v47, 0
    %vm54 = vcmp.gt.s32.totalorder %v48, 0
    %v55 = vsel %vm54, %v48, 0
    %vm56 = vcmp.gt.s32.totalorder %v49, 0
    %v57 = vsel %vm56, %v49, 0
    %vm58 = vcmp.lt.s32.totalorder %v51, 16
    %v59 = vsel %vm58, %v51, 16
    %vm60 = vcmp.lt.s32.totalorder %v53, 16
    %v61 = vsel %vm60, %v53, 16
    %vm62 = vcmp.lt.s32.totalorder %v55, 16
    %v63 = vsel %vm62, %v55, 16
    %vm64 = vcmp.lt.s32.totalorder %v57, 16
    %v65 = vsel %vm64, %v57, 16
    %vm66 = vcmp.gt.s32.totalorder %v59, 1
    %v67 = vsel %vm66, %v59, 1
    %vm68 = vcmp.gt.s32.totalorder %v61, 1
    %v69 = vsel %vm68, %v61, 1
    %vm70 = vcmp.gt.s32.totalorder %v63, 1
    %v71 = vsel %vm70, %v63, 1
    %vm72 = vcmp.gt.s32.totalorder %v65, 1
    %v73 = vsel %vm72, %v65, 1
    %v74 = vcvt.s32.f32 %v67
    %v75 = vcvt.s32.f32 %v69
    %v76 = vcvt.s32.f32 %v71
    %v77 = vcvt.s32.f32 %v73
    %v78 = vrcp.pop %v74
    %v79 = vmul.f32 1.0, %v78
    %v80 = vrcp.pop %v75
    %v81 = vmul.f32 1.0, %v80
    %v82 = vrcp.pop %v76
    %v83 = vmul.f32 1.0, %v82
    %v84 = vrcp.pop %v77
    %v85 = vmul.f32 1.0, %v84
    %v86 = vadd.f32 %v29, %v30
    %v87 = vrot.slane %v86, 4
    %v88 = vadd.f32 %v86, %v87
    %v89 = vrot.slane %v88, 2
    %v90 = vadd.f32 %v88, %v89
    %v91 = vrot.slane %v90, 1
    %v92 = vadd.f32 %v90, %v91
    %v93 = vadd.f32 %v31, %v32
    %v94 = vrot.slane %v93, 4
    %v95 = vadd.f32 %v93, %v94
    %v96 = vrot.slane %v95, 2
    %v97 = vadd.f32 %v95, %v96
    %v98 = vrot.slane %v97, 1
    %v99 = vadd.f32 %v97, %v98
    %v100 = vadd.f32 %v33, %v34
    %v101 = vrot.slane %v100, 4
    %v102 = vadd.f32 %v100, %v101
    %v103 = vrot.slane %v102, 2
    %v104 = vadd.f32 %v102, %v103
    %v105 = vrot.slane %v104, 1
    %v106 = vadd.f32 %v104, %v105
    %v107 = vadd.f32 %v35, %v36
    %v108 = vrot.slane %v107, 4
    %v109 = vadd.f32 %v107, %v108
    %v110 = vrot.slane %v109, 2
    %v111 = vadd.f32 %v109, %v110
    %v112 = vrot.slane %v111, 1
    %v113 = vadd.f32 %v111, %v112
    %v114 = vmul.f32 %v29, %v29
    %v115 = vmul.f32 %v30, %v30
    %v116 = vmul.f32 %v31, %v31
    %v117 = vmul.f32 %v32, %v32
    %v118 = vmul.f32 %v33, %v33
    %v119 = vmul.f32 %v34, %v34
    %v120 = vmul.f32 %v35, %v35
    %v121 = vmul.f32 %v36, %v36
    %v122 = vadd.f32 %v114, %v115
    %v123 = vrot.slane %v122, 4
    %v124 = vadd.f32 %v122, %v123
    %v125 = vrot.slane %v124, 2
    %v126 = vadd.f32 %v124, %v125
    %v127 = vrot.slane %v126, 1
    %v128 = vadd.f32 %v126, %v127
    %v129 = vadd.f32 %v116, %v117
    %v130 = vrot.slane %v129, 4
    %v131 = vadd.f32 %v129, %v130
    %v132 = vrot.slane %v131, 2
    %v133 = vadd.f32 %v131, %v132
    %v134 = vrot.slane %v133, 1
    %v135 = vadd.f32 %v133, %v134
    %v136 = vadd.f32 %v118, %v119
    %v137 = vrot.slane %v136, 4
    %v138 = vadd.f32 %v136, %v137
    %v139 = vrot.slane %v138, 2
    %v140 = vadd.f32 %v138, %v139
    %v141 = vrot.slane %v140, 1
    %v142 = vadd.f32 %v140, %v141
    %v143 = vadd.f32 %v120, %v121
    %v144 = vrot.slane %v143, 4
    %v145 = vadd.f32 %v143, %v144
    %v146 = vrot.slane %v145, 2
    %v147 = vadd.f32 %v145, %v146
    %v148 = vrot.slane %v147, 1
    %v149 = vadd.f32 %v147, %v148
    %v150 = vmul.f32 %v92, %v79
    %v151 = vmul.f32 %v99, %v81
    %v152 = vmul.f32 %v106, %v83
    %v153 = vmul.f32 %v113, %v85
    %v154 = vmul.f32 %v128, %v79
    %v155 = vmul.f32 %v135, %v81
    %v156 = vmul.f32 %v142, %v83
    %v157 = vmul.f32 %v149, %v85
    %v158 = vmul.f32 %v150, %v150
    %v159 = vmul.f32 %v151, %v151
    %v160 = vmul.f32 %v152, %v152
    %v161 = vmul.f32 %v153, %v153
    %v162 = vsub.f32 %v154, %v158
    %v163 = vsub.f32 %v155, %v159
    %v164 = vsub.f32 %v156, %v160
    %v165 = vsub.f32 %v157, %v161
    %v166 = vmax.f32 %v162, 0.0
    %v167 = vmax.f32 %v163, 0.0
    %v168 = vmax.f32 %v164, 0.0
    %v169 = vmax.f32 %v165, 0.0
    %v170 = vadd.f32 %v166, 1e-05
    %v171 = vadd.f32 %v167, 1e-05
    %v172 = vadd.f32 %v168, 1e-05
    %v173 = vadd.f32 %v169, 1e-05
    %v174 = vrsqrt.pop %v170
    %v175 = vrsqrt.pop %v171
    %v176 = vrsqrt.pop %v172
    %v177 = vrsqrt.pop %v173
    %v178 = vld [vmem:[%s1] sm:$0x1]
    %v179 = vld [vmem:[%s2] sm:$0x1]
    %v180 = vmul.f32 %v174, %v178
    %v181 = vmul.f32 %v175, %v178
    %v182 = vmul.f32 %v176, %v178
    %v183 = vmul.f32 %v177, %v178
    %v184 = vmul.f32 %v150, %v180
    %v185 = vmul.f32 %v151, %v181
    %v186 = vmul.f32 %v152, %v182
    %v187 = vmul.f32 %v153, %v183
    %v188 = vsub.f32 %v179, %v184
    %v189 = vsub.f32 %v179, %v185
    %v190 = vsub.f32 %v179, %v186
    %v191 = vsub.f32 %v179, %v187
    %v192 = vlaneseq
    %v193 = vshrl.u32 %v192, 7
    %v194 = vsub.s32 0, %v193
    %v195 = vrot.slane %v180, %v194
    %v196 = vlaneseq
    %v197 = vshrl.u32 %v196, 7
    %v198 = vsub.s32 0, %v197
    %v199 = vrot.slane %v181, %v198
    %v200 = vlaneseq
    %v201 = vshrl.u32 %v200, 7
    %v202 = vsub.s32 0, %v201
    %v203 = vrot.slane %v182, %v202
    %v204 = vlaneseq
    %v205 = vshrl.u32 %v204, 7
    %v206 = vsub.s32 0, %v205
    %v207 = vrot.slane %v183, %v206
    %v208 = vmul.f32 %v29, %v195
    %v209 = vmul.f32 %v30, %v195
    %v210 = vmul.f32 %v31, %v199
    %v211 = vmul.f32 %v32, %v199
    %v212 = vmul.f32 %v33, %v203
    %v213 = vmul.f32 %v34, %v203
    %v214 = vmul.f32 %v35, %v207
    %v215 = vmul.f32 %v36, %v207
    %v220 = vlaneseq
    %v221 = vshrl.u32 %v220, 7
    %v222 = vsub.s32 0, %v221
    %v223 = vrot.slane %v188, %v222
    %v224 = vlaneseq
    %v225 = vshrl.u32 %v224, 7
    %v226 = vsub.s32 0, %v225
    %v227 = vrot.slane %v189, %v226
    %v228 = vlaneseq
    %v229 = vshrl.u32 %v228, 7
    %v230 = vsub.s32 0, %v229
    %v231 = vrot.slane %v190, %v230
    %v232 = vlaneseq
    %v233 = vshrl.u32 %v232, 7
    %v234 = vsub.s32 0, %v233
    %v235 = vrot.slane %v191, %v234
    %v240 = vadd.f32 %v208, %v223
    %v241 = vadd.f32 %v209, %v223
    %v242 = vadd.f32 %v210, %v227
    %v243 = vadd.f32 %v211, %v227
    %v244 = vadd.f32 %v212, %v231
    %v245 = vadd.f32 %v213, %v231
    %v246 = vadd.f32 %v214, %v235
    %v247 = vadd.f32 %v215, %v235
    %248 = vst [vmem:[#allocation5] sm:$0xff] %v240
    %249 = vst [vmem:[#allocation5 + $0x8] sm:$0xff] %v241
    %250 = vst [vmem:[#allocation5 + $0x10] sm:$0xff] %v242
    %251 = vst [vmem:[#allocation5 + $0x18] sm:$0xff] %v243
    %252 = vst [vmem:[#allocation5 + $0x20] sm:$0xff] %v244
    %253 = vst [vmem:[#allocation5 + $0x28] sm:$0xff] %v245
    %254 = vst [vmem:[#allocation5 + $0x30] sm:$0xff] %v246
    %255 = vst [vmem:[#allocation5 + $0x38] sm:$0xff] %v247
    // Predicated region
    $region18: #{tpu_custom_call.1} parent=1 // pred_check
      _
    $region19: #{tpu_custom_call.1} parent=1 // pred_check_branch
      %257 = sbr.rel (0) target = $region21
    $region20: #{tpu_custom_call.1} parent=1 // pred_region
      %s259 = ssub.s32 1024, 1024
      %260 = vsyncadd [#allocation4], %s259
      %s261 = sshll.u32 [#allocation5], 4
      %s262 = int_to_ptr.vmem [resolvable:$true] %s261
      %267 = dma.vmem_to_hbm [thread:$0]  %s262, 1024, %s3, [#allocation4], 128, 128, 8
    $region21: #{tpu_custom_call.1} parent=1 // pred_fallthru
      _
    // Predicated region
    $region22: #{tpu_custom_call.1} parent=1 // pred_check
      _
    $region23: #{tpu_custom_call.1} parent=1 // pred_check_branch
      %269 = sbr.rel (0) target = $region25
    $region24: #{tpu_custom_call.1} parent=1 // pred_region
      %270 = dma.done [#allocation4], 1024
    $region25: #{tpu_custom_call.1} parent=1 // pred_fallthru
      _
    %271 = vsyncpa [#allocation3], 1
    %272 = vsyncpa [#allocation4], 1

</llo_original>
